<compile_context>
chip_gen: v6e
topology: v6e:2x2x1
jax: 0.10.0
libtpu: 0.0.40
codegen_flags: <defaults>
</compile_context>

<pallas_src>
import jax
import jax.numpy as jnp
from jax.experimental import pallas as pl
from jax.experimental.pallas import tpu as pltpu

LEVELS = 16  # quantization levels of the wrapped forward
_SCALE = float(LEVELS - 1)
_INV_SCALE = 1.0 / float(LEVELS - 1)

_TARGET_BLOCK_BYTES = 2 * 1024 * 1024   # ~2 MiB per block; in+out double-buffered = 8 MiB VMEM
_PALLAS_MIN_ELEMS = 64 * 1024           # below this, kernel-launch glue dominates -> pure jnp


# ----------------------------- Pallas kernel ------------------------------ #
def _quantize_kernel(x_ref, o_ref):
    # elementwise non-differentiable quantization (the BPDA-wrapped forward)
    # compute in f32 (safe on v5e's f32-only VALU), stream I/O at native width
    x = x_ref[...].astype(jnp.float32)
    xc = jnp.clip(x, 0.0, 1.0)
    o_ref[...] = (jnp.round(xc * _SCALE) * _INV_SCALE).astype(o_ref.dtype)


def _choose_lanes(n):
    """Widest lane-dense last dim such that rows = n // lanes is a multiple of 8."""
    for lanes in (4096, 2048, 1024, 512, 256, 128):
        if n % (8 * lanes) == 0:
            return lanes
    return None


def _quantize_2d(x2d):
    """x2d: (rows, lanes) with rows % 8 == 0 and lanes % 128 == 0."""
    rows, lanes = x2d.shape
    itemsize = jnp.dtype(x2d.dtype).itemsize
    # Big blocks (~2 MiB) so per-grid-step pipeline overhead amortizes;
    # rounded down to a multiple of 8 sublanes, capped at the full extent.
    block_rows = (_TARGET_BLOCK_BYTES // (lanes * itemsize)) // 8 * 8
    block_rows = int(max(8, min(rows, block_rows)))
    grid = (pl.cdiv(rows, block_rows),)
    return pl.pallas_call(
        _quantize_kernel,
        out_shape=jax.ShapeDtypeStruct((rows, lanes), x2d.dtype),
        grid=grid,
        in_specs=[pl.BlockSpec((block_rows, lanes), lambda i: (i, 0))],
        out_specs=pl.BlockSpec((block_rows, lanes), lambda i: (i, 0)),
        compiler_params=pltpu.CompilerParams(
            dimension_semantics=("parallel",),  # shards across v7x's 2 TCs; no-op on v5e/v6e
        ),
    )(x2d)


def _quantize_ref(x):
    """Pure-jnp reference / small-input fallback (identical formula to the kernel)."""
    xf = x.astype(jnp.float32)
    return (jnp.round(jnp.clip(xf, 0.0, 1.0) * _SCALE) * _INV_SCALE).astype(x.dtype)


def quantize_forward(x):
    """The wrapped (non-differentiable) forward: any shape in, same shape/dtype out."""
    n = x.size
    lanes = _choose_lanes(n)
    if n < _PALLAS_MIN_ELEMS or lanes is None:
        # Tiny or oddly-sized tensors: kernel glue would dominate; use pure jnp.
        return _quantize_ref(x)
    # Contiguous lane-dense 2D view: pure metadata reshape, no pad, no copy.
    x2d = x.reshape(n // lanes, lanes)
    return _quantize_2d(x2d).reshape(x.shape)


# ----------------------------- BPDAWrapper -------------------------------- #
def _create_backward_from_forwardsub(forwardsub):
    def backward(grad_output, x):
        _, vjp_fn = jax.vjp(forwardsub, x)
        return vjp_fn(grad_output)[0]
    return backward


def _create_identity_function():
    def identity(grad_output, x):
        return grad_output
    return identity


class BPDAWrapper:
    """JAX port of advertorch's BPDAWrapper.

    forward:    callable(x) -> y  (used for the forward pass, values exact)
    forwardsub: substitute differentiable forward used only for gradients
    backward:   callable(grad_output, x) -> grad_x  (ignored if forwardsub
                is given; defaults to identity / straight-through)
    """

    def __init__(self, forward, forwardsub=None, backward=None):
        if forwardsub is not None:
            backward = _create_backward_from_forwardsub(forwardsub)
        elif backward is None:
            backward = _create_identity_function()

        @jax.custom_vjp
        def _fn(x):
            return forward(x)

        def _fwd(x):
            # mirrors ctx.save_for_backward(x)
            return forward(x), x

        def _bwd(x_saved, grad_output):
            return (backward(grad_output, x_saved),)

        _fn.defvjp(_fwd, _bwd)
        self._fn = _fn

    def __call__(self, x):
        return self._fn(x)


# --------------------------------- main ------------------------------------ #
if __name__ == "__main__":
    key = jax.random.PRNGKey(0)
    k1, k2 = jax.random.split(key)

    # Small demo shape from the module spec (size-gated -> pure-jnp fallback).
    x_small = jax.random.uniform(k1, (2, 4, 16, 16), dtype=jnp.float32)  # NCHW
    # Larger input that exercises the Pallas kernel path.
    x_big = jax.random.uniform(k2, (4, 4, 64, 128), dtype=jnp.float32)   # NCHW

    # Default BPDA: identity (straight-through) backward.
    bpda = BPDAWrapper(quantize_forward)

    # --- Pallas kernel path (forward values exact, backward straight-through) ---
    y_big = jax.block_until_ready(bpda(x_big))
    assert y_big.shape == x_big.shape and y_big.dtype == x_big.dtype
    assert jnp.allclose(y_big, _quantize_ref(x_big), atol=1e-6)

    g_big = jax.block_until_ready(jax.grad(lambda t: jnp.sum(bpda(t) * 3.0))(x_big))
    assert jnp.allclose(g_big, jnp.full_like(x_big, 3.0), atol=1e-6)

    # --- small-input fallback path ---
    y_small = jax.block_until_ready(bpda(x_small))
    assert y_small.shape == x_small.shape and y_small.dtype == x_small.dtype
    assert jnp.allclose(y_small, _quantize_ref(x_small), atol=1e-6)
    g_small = jax.block_until_ready(jax.grad(lambda t: jnp.sum(bpda(t)))(x_small))
    assert jnp.allclose(g_small, jnp.ones_like(x_small), atol=1e-6)

    # --- forwardsub path (gradient of a substitute differentiable forward) ---
    bpda_sub = BPDAWrapper(quantize_forward, forwardsub=lambda t: jnp.clip(t, 0.0, 1.0))
    g_sub = jax.block_until_ready(jax.grad(lambda t: jnp.sum(bpda_sub(t)))(x_big))
    assert g_sub.shape == x_big.shape and bool(jnp.all(jnp.isfinite(g_sub)))

    # --- bf16 streaming path: kernel I/O stays bf16, compute widened in-register ---
    xb = x_big.astype(jnp.bfloat16)
    yb = jax.block_until_ready(quantize_forward(xb))
    assert yb.dtype == jnp.bfloat16 and yb.shape == xb.shape
    assert jnp.allclose(yb.astype(jnp.float32),
                        _quantize_ref(xb).astype(jnp.float32), atol=1e-2)

    print("KERNEL_OK")
</pallas_src>

<mosaic_0001>
module attributes {stable_mosaic.version = 11 : i64} {
  func.func @_quantize_kernel(%arg0: i32, %arg1: memref<32x4096xf32, #tpu.memory_space<vmem>>, %arg2: memref<32x4096xf32, #tpu.memory_space<vmem>>) attributes {dimension_semantics = [#tpu.dimension_semantics<parallel>], iteration_bounds = array<i64: 1>, scalar_prefetch = 0 : i64, scratch_operands = 0 : i64, tpu.core_type = #tpu.core_type<tc>, window_params = [{transform_indices = @transform_0, window_bounds = array<i64: 32, 4096>}, {transform_indices = @transform_1, window_bounds = array<i64: 32, 4096>}]} {
    %c0 = arith.constant 0 : index
    %c0_0 = arith.constant 0 : index
    %0 = vector.load %arg1[%c0, %c0_0] : memref<32x4096xf32, #tpu.memory_space<vmem>>, vector<32x4096xf32>
    %cst = arith.constant 0.000000e+00 : f32
    %cst_1 = arith.constant 1.000000e+00 : f32
    %1 = vector.broadcast %cst : f32 to vector<32x4096xf32>
    %2 = arith.maximumf %1, %0 : vector<32x4096xf32>
    %3 = vector.broadcast %cst_1 : f32 to vector<32x4096xf32>
    %4 = arith.minimumf %3, %2 : vector<32x4096xf32>
    %cst_2 = arith.constant 1.500000e+01 : f32
    %5 = vector.broadcast %cst_2 : f32 to vector<32x4096xf32>
    %6 = arith.mulf %4, %5 : vector<32x4096xf32>
    %7 = math.roundeven %6 : vector<32x4096xf32>
    %cst_3 = arith.constant 0.0666666701 : f32
    %8 = vector.broadcast %cst_3 : f32 to vector<32x4096xf32>
    %9 = arith.mulf %7, %8 : vector<32x4096xf32>
    %c0_4 = arith.constant 0 : index
    %c0_5 = arith.constant 0 : index
    %10 = vector.load %arg2[%c0_4, %c0_5] : memref<32x4096xf32, #tpu.memory_space<vmem>>, vector<32x4096xf32>
    tpu.vector_store %arg2[%c0_4, %c0_5], %9 {strides = array<i32>} : memref<32x4096xf32, #tpu.memory_space<vmem>>, vector<32x4096xf32>,
    return
  }
  func.func @transform_0(%arg0: i32) -> (i32, i32) {
    %c0_i32 = arith.constant 0 : i32
    %c0_i32_0 = arith.constant 0 : i32
    return %arg0, %c0_i32 : i32, i32
  }
  func.func @transform_1(%arg0: i32) -> (i32, i32) {
    %c0_i32 = arith.constant 0 : i32
    %c0_i32_0 = arith.constant 0 : i32
    return %arg0, %c0_i32 : i32, i32
  }
}

</mosaic_0001>

<llo_original>
// kernel: tpu_custom_call.1
$region0: #{tpu_custom_call.1}
  #allocation0 [shape = 'u32[]', space=smem, size = 0x4, offset = 0x4, fixed_abs, tag = 'smem constant byte address 0x4 - core index']
  #allocation1 [shape = 'u32[144,128]{1,0:T(1,128)}', space=vmem, size = 0x12000, scoped, tag = 'internal scratch']
  %s0 = inlined_call_operand.hbm [shape: f32[32,4096], index: 0, kind: input, shape index: {}]
  %s1 = inlined_call_operand.hbm [shape: f32[32,4096], index: 1, kind: output, shape index: {}]
  %s2 = sld [smem:[#allocation0]]
  $region18: #{tpu_custom_call.1} parent=0
    _
  %s4 = ssub.s32 1, %s2
  %s5 = scalar_select 0, %s4, %s2
  $region1: #{tpu_custom_call.1} parent=0
    #allocation2 [shape = 'u8[524288]{0}', space=vmem, size = 0x80000, scoped, tag = 'input window, operand 0, single buffered']
    #allocation3 [shape = 's32[1]{0}', space=sflag, size = 0x4, scoped, tag = 'scoped memory for tpu_custom_call.1']
    #allocation4 [shape = 's32[1]{0}', space=sflag, size = 0x4, scoped, tag = 'scoped memory for tpu_custom_call.1']
    #allocation5 [shape = 'u8[524288]{0}', space=vmem, size = 0x80000, scoped, tag = 'output window, operand 0, single buffered']
    %6 = vsyncpa [#allocation3], 0
    %7 = vsyncpa [#allocation4], 0
    // Predicated region
    $region2: #{tpu_custom_call.1} parent=1 // pred_check
      _
    $region3: #{tpu_custom_call.1} parent=1 // pred_check_branch
      %9 = sbr.rel (0) target = $region5
    $region4: #{tpu_custom_call.1} parent=1 // pred_region
      %s11 = ssub.s32 16384, 16384
      %12 = vsyncadd [#allocation3], %s11
      %s13 = sshll.u32 [#allocation2], 4
      %s14 = int_to_ptr.vmem [resolvable:$true] %s13
      %19 = dma.hbm_to_vmem [thread:$0]  %s0, 16384, %s14, [#allocation3], 4096, 4096, 256
    $region5: #{tpu_custom_call.1} parent=1 // pred_fallthru
      _
    // Predicated region
    $region6: #{tpu_custom_call.1} parent=1 // pred_check
      _
    $region7: #{tpu_custom_call.1} parent=1 // pred_check_branch
      %21 = sbr.rel (0) target = $region9
    $region8: #{tpu_custom_call.1} parent=1 // pred_region
      %22 = dma.done [#allocation3], 16384
    $region9: #{tpu_custom_call.1} parent=1 // pred_fallthru
      _
    %v23 = vld [vmem:[#allocation2] sm:$0xff]
    %v24 = vld [vmem:[#allocation2 + $0x8] sm:$0xff]
    %v25 = vld [vmem:[#allocation2 + $0x10] sm:$0xff]
    %v26 = vld [vmem:[#allocation2 + $0x18] sm:$0xff]
    %v27 = vld [vmem:[#allocation2 + $0x20] sm:$0xff]
    %v28 = vld [vmem:[#allocation2 + $0x28] sm:$0xff]
    %v29 = vld [vmem:[#allocation2 + $0x30] sm:$0xff]
    %v30 = vld [vmem:[#allocation2 + $0x38] sm:$0xff]
    %v31 = vld [vmem:[#allocation2 + $0x40] sm:$0xff]
    %v32 = vld [vmem:[#allocation2 + $0x48] sm:$0xff]
    %v33 = vld [vmem:[#allocation2 + $0x50] sm:$0xff]
    %v34 = vld [vmem:[#allocation2 + $0x58] sm:$0xff]
    %v35 = vld [vmem:[#allocation2 + $0x60] sm:$0xff]
    %v36 = vld [vmem:[#allocation2 + $0x68] sm:$0xff]
    %v37 = vld [vmem:[#allocation2 + $0x70] sm:$0xff]
    %v38 = vld [vmem:[#allocation2 + $0x78] sm:$0xff]
    %v39 = vld [vmem:[#allocation2 + $0x80] sm:$0xff]
    %v40 = vld [vmem:[#allocation2 + $0x88] sm:$0xff]
    %v41 = vld [vmem:[#allocation2 + $0x90] sm:$0xff]
    %v42 = vld [vmem:[#allocation2 + $0x98] sm:$0xff]
    %v43 = vld [vmem:[#allocation2 + $0xa0] sm:$0xff]
    %v44 = vld [vmem:[#allocation2 + $0xa8] sm:$0xff]
    %v45 = vld [vmem:[#allocation2 + $0xb0] sm:$0xff]
    %v46 = vld [vmem:[#allocation2 + $0xb8] sm:$0xff]
    %v47 = vld [vmem:[#allocation2 + $0xc0] sm:$0xff]
    %v48 = vld [vmem:[#allocation2 + $0xc8] sm:$0xff]
    %v49 = vld [vmem:[#allocation2 + $0xd0] sm:$0xff]
    %v50 = vld [vmem:[#allocation2 + $0xd8] sm:$0xff]
    %v51 = vld [vmem:[#allocation2 + $0xe0] sm:$0xff]
    %v52 = vld [vmem:[#allocation2 + $0xe8] sm:$0xff]
    %v53 = vld [vmem:[#allocation2 + $0xf0] sm:$0xff]
    %v54 = vld [vmem:[#allocation2 + $0xf8] sm:$0xff]
    %v55 = vld [vmem:[#allocation2 + $0x100] sm:$0xff]
    %v56 = vld [vmem:[#allocation2 + $0x108] sm:$0xff]
    %v57 = vld [vmem:[#allocation2 + $0x110] sm:$0xff]
    %v58 = vld [vmem:[#allocation2 + $0x118] sm:$0xff]
    %v59 = vld [vmem:[#allocation2 + $0x120] sm:$0xff]
    %v60 = vld [vmem:[#allocation2 + $0x128] sm:$0xff]
    %v61 = vld [vmem:[#allocation2 + $0x130] sm:$0xff]
    %v62 = vld [vmem:[#allocation2 + $0x138] sm:$0xff]
    %v63 = vld [vmem:[#allocation2 + $0x140] sm:$0xff]
    %v64 = vld [vmem:[#allocation2 + $0x148] sm:$0xff]
    %v65 = vld [vmem:[#allocation2 + $0x150] sm:$0xff]
    %v66 = vld [vmem:[#allocation2 + $0x158] sm:$0xff]
    %v67 = vld [vmem:[#allocation2 + $0x160] sm:$0xff]
    %v68 = vld [vmem:[#allocation2 + $0x168] sm:$0xff]
    %v69 = vld [vmem:[#allocation2 + $0x170] sm:$0xff]
    %v70 = vld [vmem:[#allocation2 + $0x178] sm:$0xff]
    %v71 = vld [vmem:[#allocation2 + $0x180] sm:$0xff]
    %v72 = vld [vmem:[#allocation2 + $0x188] sm:$0xff]
    %v73 = vld [vmem:[#allocation2 + $0x190] sm:$0xff]
    %v74 = vld [vmem:[#allocation2 + $0x198] sm:$0xff]
    %v75 = vld [vmem:[#allocation2 + $0x1a0] sm:$0xff]
    %v76 = vld [vmem:[#allocation2 + $0x1a8] sm:$0xff]
    %v77 = vld [vmem:[#allocation2 + $0x1b0] sm:$0xff]
    %v78 = vld [vmem:[#allocation2 + $0x1b8] sm:$0xff]
    %v79 = vld [vmem:[#allocation2 + $0x1c0] sm:$0xff]
    %v80 = vld [vmem:[#allocation2 + $0x1c8] sm:$0xff]
    %v81 = vld [vmem:[#allocation2 + $0x1d0] sm:$0xff]
    %v82 = vld [vmem:[#allocation2 + $0x1d8] sm:$0xff]
    %v83 = vld [vmem:[#allocation2 + $0x1e0] sm:$0xff]
    %v84 = vld [vmem:[#allocation2 + $0x1e8] sm:$0xff]
    %v85 = vld [vmem:[#allocation2 + $0x1f0] sm:$0xff]
    %v86 = vld [vmem:[#allocation2 + $0x1f8] sm:$0xff]
    %v87 = vld [vmem:[#allocation2 + $0x200] sm:$0xff]
    %v88 = vld [vmem:[#allocation2 + $0x208] sm:$0xff]
    %v89 = vld [vmem:[#allocation2 + $0x210] sm:$0xff]
    %v90 = vld [vmem:[#allocation2 + $0x218] sm:$0xff]
    %v91 = vld [vmem:[#allocation2 + $0x220] sm:$0xff]
    %v92 = vld [vmem:[#allocation2 + $0x228] sm:$0xff]
    %v93 = vld [vmem:[#allocation2 + $0x230] sm:$0xff]
    %v94 = vld [vmem:[#allocation2 + $0x238] sm:$0xff]
    %v95 = vld [vmem:[#allocation2 + $0x240] sm:$0xff]
    %v96 = vld [vmem:[#allocation2 + $0x248] sm:$0xff]
    %v97 = vld [vmem:[#allocation2 + $0x250] sm:$0xff]
    %v98 = vld [vmem:[#allocation2 + $0x258] sm:$0xff]
    %v99 = vld [vmem:[#allocation2 + $0x260] sm:$0xff]
    %v100 = vld [vmem:[#allocation2 + $0x268] sm:$0xff]
    %v101 = vld [vmem:[#allocation2 + $0x270] sm:$0xff]
    %v102 = vld [vmem:[#allocation2 + $0x278] sm:$0xff]
    %v103 = vld [vmem:[#allocation2 + $0x280] sm:$0xff]
    %v104 = vld [vmem:[#allocation2 + $0x288] sm:$0xff]
    %v105 = vld [vmem:[#allocation2 + $0x290] sm:$0xff]
    %v106 = vld [vmem:[#allocation2 + $0x298] sm:$0xff]
    %v107 = vld [vmem:[#allocation2 + $0x2a0] sm:$0xff]
    %v108 = vld [vmem:[#allocation2 + $0x2a8] sm:$0xff]
    %v109 = vld [vmem:[#allocation2 + $0x2b0] sm:$0xff]
    %v110 = vld [vmem:[#allocation2 + $0x2b8] sm:$0xff]
    %v111 = vld [vmem:[#allocation2 + $0x2c0] sm:$0xff]
    %v112 = vld [vmem:[#allocation2 + $0x2c8] sm:$0xff]
    %v113 = vld [vmem:[#allocation2 + $0x2d0] sm:$0xff]
    %v114 = vld [vmem:[#allocation2 + $0x2d8] sm:$0xff]
    %v115 = vld [vmem:[#allocation2 + $0x2e0] sm:$0xff]
    %v116 = vld [vmem:[#allocation2 + $0x2e8] sm:$0xff]
    %v117 = vld [vmem:[#allocation2 + $0x2f0] sm:$0xff]
    %v118 = vld [vmem:[#allocation2 + $0x2f8] sm:$0xff]
    %v119 = vld [vmem:[#allocation2 + $0x300] sm:$0xff]
    %v120 = vld [vmem:[#allocation2 + $0x308] sm:$0xff]
    %v121 = vld [vmem:[#allocation2 + $0x310] sm:$0xff]
    %v122 = vld [vmem:[#allocation2 + $0x318] sm:$0xff]
    %v123 = vld [vmem:[#allocation2 + $0x320] sm:$0xff]
    %v124 = vld [vmem:[#allocation2 + $0x328] sm:$0xff]
    %v125 = vld [vmem:[#allocation2 + $0x330] sm:$0xff]
    %v126 = vld [vmem:[#allocation2 + $0x338] sm:$0xff]
    %v127 = vld [vmem:[#allocation2 + $0x340] sm:$0xff]
    %v128 = vld [vmem:[#allocation2 + $0x348] sm:$0xff]
    %v129 = vld [vmem:[#allocation2 + $0x350] sm:$0xff]
    %v130 = vld [vmem:[#allocation2 + $0x358] sm:$0xff]
    %v131 = vld [vmem:[#allocation2 + $0x360] sm:$0xff]
    %v132 = vld [vmem:[#allocation2 + $0x368] sm:$0xff]
    %v133 = vld [vmem:[#allocation2 + $0x370] sm:$0xff]
    %v134 = vld [vmem:[#allocation2 + $0x378] sm:$0xff]
    %v135 = vld [vmem:[#allocation2 + $0x380] sm:$0xff]
    %v136 = vld [vmem:[#allocation2 + $0x388] sm:$0xff]
    %v137 = vld [vmem:[#allocation2 + $0x390] sm:$0xff]
    %v138 = vld [vmem:[#allocation2 + $0x398] sm:$0xff]
    %v139 = vld [vmem:[#allocation2 + $0x3a0] sm:$0xff]
    %v140 = vld [vmem:[#allocation2 + $0x3a8] sm:$0xff]
    %v141 = vld [vmem:[#allocation2 + $0x3b0] sm:$0xff]
    %v142 = vld [vmem:[#allocation2 + $0x3b8] sm:$0xff]
    %v143 = vld [vmem:[#allocation2 + $0x3c0] sm:$0xff]
    %v144 = vld [vmem:[#allocation2 + $0x3c8] sm:$0xff]
    %v145 = vld [vmem:[#allocation2 + $0x3d0] sm:$0xff]
    %v146 = vld [vmem:[#allocation2 + $0x3d8] sm:$0xff]
    %v147 = vld [vmem:[#allocation2 + $0x3e0] sm:$0xff]
    %v148 = vld [vmem:[#allocation2 + $0x3e8] sm:$0xff]
    %v149 = vld [vmem:[#allocation2 + $0x3f0] sm:$0xff]
    %v150 = vld [vmem:[#allocation2 + $0x3f8] sm:$0xff]
    %v151 = vmax.f32 %v23, 0.0
    %v152 = vmax.f32 %v24, 0.0
    %v153 = vmax.f32 %v25, 0.0
    %v154 = vmax.f32 %v26, 0.0
    %v155 = vmax.f32 %v27, 0.0
    %v156 = vmax.f32 %v28, 0.0
    %v157 = vmax.f32 %v29, 0.0
    %v158 = vmax.f32 %v30, 0.0
    %v159 = vmax.f32 %v31, 0.0
    %v160 = vmax.f32 %v32, 0.0
    %v161 = vmax.f32 %v33, 0.0
    %v162 = vmax.f32 %v34, 0.0
    %v163 = vmax.f32 %v35, 0.0
    %v164 = vmax.f32 %v36, 0.0
    %v165 = vmax.f32 %v37, 0.0
    %v166 = vmax.f32 %v38, 0.0
    %v167 = vmax.f32 %v39, 0.0
    %v168 = vmax.f32 %v40, 0.0
    %v169 = vmax.f32 %v41, 0.0
    %v170 = vmax.f32 %v42, 0.0
    %v171 = vmax.f32 %v43, 0.0
    %v172 = vmax.f32 %v44, 0.0
    %v173 = vmax.f32 %v45, 0.0
    %v174 = vmax.f32 %v46, 0.0
    %v175 = vmax.f32 %v47, 0.0
    %v176 = vmax.f32 %v48, 0.0
    %v177 = vmax.f32 %v49, 0.0
    %v178 = vmax.f32 %v50, 0.0
    %v179 = vmax.f32 %v51, 0.0
    %v180 = vmax.f32 %v52, 0.0
    %v181 = vmax.f32 %v53, 0.0
    %v182 = vmax.f32 %v54, 0.0
    %v183 = vmax.f32 %v55, 0.0
    %v184 = vmax.f32 %v56, 0.0
    %v185 = vmax.f32 %v57, 0.0
    %v186 = vmax.f32 %v58, 0.0
    %v187 = vmax.f32 %v59, 0.0
    %v188 = vmax.f32 %v60, 0.0
    %v189 = vmax.f32 %v61, 0.0
    %v190 = vmax.f32 %v62, 0.0
    %v191 = vmax.f32 %v63, 0.0
    %v192 = vmax.f32 %v64, 0.0
    %v193 = vmax.f32 %v65, 0.0
    %v194 = vmax.f32 %v66, 0.0
    %v195 = vmax.f32 %v67, 0.0
    %v196 = vmax.f32 %v68, 0.0
    %v197 = vmax.f32 %v69, 0.0
    %v198 = vmax.f32 %v70, 0.0
    %v199 = vmax.f32 %v71, 0.0
    %v200 = vmax.f32 %v72, 0.0
    %v201 = vmax.f32 %v73, 0.0
    %v202 = vmax.f32 %v74, 0.0
    %v203 = vmax.f32 %v75, 0.0
    %v204 = vmax.f32 %v76, 0.0
    %v205 = vmax.f32 %v77, 0.0
    %v206 = vmax.f32 %v78, 0.0
    %v207 = vmax.f32 %v79, 0.0
    %v208 = vmax.f32 %v80, 0.0
    %v209 = vmax.f32 %v81, 0.0
    %v210 = vmax.f32 %v82, 0.0
    %v211 = vmax.f32 %v83, 0.0
    %v212 = vmax.f32 %v84, 0.0
    %v213 = vmax.f32 %v85, 0.0
    %v214 = vmax.f32 %v86, 0.0
    %v215 = vmax.f32 %v87, 0.0
    %v216 = vmax.f32 %v88, 0.0
    %v217 = vmax.f32 %v89, 0.0
    %v218 = vmax.f32 %v90, 0.0
    %v219 = vmax.f32 %v91, 0.0
    %v220 = vmax.f32 %v92, 0.0
    %v221 = vmax.f32 %v93, 0.0
    %v222 = vmax.f32 %v94, 0.0
    %v223 = vmax.f32 %v95, 0.0
    %v224 = vmax.f32 %v96, 0.0
    %v225 = vmax.f32 %v97, 0.0
    %v226 = vmax.f32 %v98, 0.0
    %v227 = vmax.f32 %v99, 0.0
    %v228 = vmax.f32 %v100, 0.0
    %v229 = vmax.f32 %v101, 0.0
    %v230 = vmax.f32 %v102, 0.0
    %v231 = vmax.f32 %v103, 0.0
    %v232 = vmax.f32 %v104, 0.0
    %v233 = vmax.f32 %v105, 0.0
    %v234 = vmax.f32 %v106, 0.0
    %v235 = vmax.f32 %v107, 0.0
    %v236 = vmax.f32 %v108, 0.0
    %v237 = vmax.f32 %v109, 0.0
    %v238 = vmax.f32 %v110, 0.0
    %v239 = vmax.f32 %v111, 0.0
    %v240 = vmax.f32 %v112, 0.0
    %v241 = vmax.f32 %v113, 0.0
    %v242 = vmax.f32 %v114, 0.0
    %v243 = vmax.f32 %v115, 0.0
    %v244 = vmax.f32 %v116, 0.0
    %v245 = vmax.f32 %v117, 0.0
    %v246 = vmax.f32 %v118, 0.0
    %v247 = vmax.f32 %v119, 0.0
    %v248 = vmax.f32 %v120, 0.0
    %v249 = vmax.f32 %v121, 0.0
    %v250 = vmax.f32 %v122, 0.0
    %v251 = vmax.f32 %v123, 0.0
    %v252 = vmax.f32 %v124, 0.0
    %v253 = vmax.f32 %v125, 0.0
    %v254 = vmax.f32 %v126, 0.0
    %v255 = vmax.f32 %v127, 0.0
    %v256 = vmax.f32 %v128, 0.0
    %v257 = vmax.f32 %v129, 0.0
    %v258 = vmax.f32 %v130, 0.0
    %v259 = vmax.f32 %v131, 0.0
    %v260 = vmax.f32 %v132, 0.0
    %v261 = vmax.f32 %v133, 0.0
    %v262 = vmax.f32 %v134, 0.0
    %v263 = vmax.f32 %v135, 0.0
    %v264 = vmax.f32 %v136, 0.0
    %v265 = vmax.f32 %v137, 0.0
    %v266 = vmax.f32 %v138, 0.0
    %v267 = vmax.f32 %v139, 0.0
    %v268 = vmax.f32 %v140, 0.0
    %v269 = vmax.f32 %v141, 0.0
    %v270 = vmax.f32 %v142, 0.0
    %v271 = vmax.f32 %v143, 0.0
    %v272 = vmax.f32 %v144, 0.0
    %v273 = vmax.f32 %v145, 0.0
    %v274 = vmax.f32 %v146, 0.0
    %v275 = vmax.f32 %v147, 0.0
    %v276 = vmax.f32 %v148, 0.0
    %v277 = vmax.f32 %v149, 0.0
    %v278 = vmax.f32 %v150, 0.0
    %v279 = vmin.f32 %v151, 1.0
    %v280 = vmin.f32 %v152, 1.0
    %v281 = vmin.f32 %v153, 1.0
    %v282 = vmin.f32 %v154, 1.0
    %v283 = vmin.f32 %v155, 1.0
    %v284 = vmin.f32 %v156, 1.0
    %v285 = vmin.f32 %v157, 1.0
    %v286 = vmin.f32 %v158, 1.0
    %v287 = vmin.f32 %v159, 1.0
    %v288 = vmin.f32 %v160, 1.0
    %v289 = vmin.f32 %v161, 1.0
    %v290 = vmin.f32 %v162, 1.0
    %v291 = vmin.f32 %v163, 1.0
    %v292 = vmin.f32 %v164, 1.0
    %v293 = vmin.f32 %v165, 1.0
    %v294 = vmin.f32 %v166, 1.0
    %v295 = vmin.f32 %v167, 1.0
    %v296 = vmin.f32 %v168, 1.0
    %v297 = vmin.f32 %v169, 1.0
    %v298 = vmin.f32 %v170, 1.0
    %v299 = vmin.f32 %v171, 1.0
    %v300 = vmin.f32 %v172, 1.0
    %v301 = vmin.f32 %v173, 1.0
    %v302 = vmin.f32 %v174, 1.0
    %v303 = vmin.f32 %v175, 1.0
    %v304 = vmin.f32 %v176, 1.0
    %v305 = vmin.f32 %v177, 1.0
    %v306 = vmin.f32 %v178, 1.0
    %v307 = vmin.f32 %v179, 1.0
    %v308 = vmin.f32 %v180, 1.0
    %v309 = vmin.f32 %v181, 1.0
    %v310 = vmin.f32 %v182, 1.0
    %v311 = vmin.f32 %v183, 1.0
    %v312 = vmin.f32 %v184, 1.0
    %v313 = vmin.f32 %v185, 1.0
    %v314 = vmin.f32 %v186, 1.0
    %v315 = vmin.f32 %v187, 1.0
    %v316 = vmin.f32 %v188, 1.0
    %v317 = vmin.f32 %v189, 1.0
    %v318 = vmin.f32 %v190, 1.0
    %v319 = vmin.f32 %v191, 1.0
    %v320 = vmin.f32 %v192, 1.0
    %v321 = vmin.f32 %v193, 1.0
    %v322 = vmin.f32 %v194, 1.0
    %v323 = vmin.f32 %v195, 1.0
    %v324 = vmin.f32 %v196, 1.0
    %v325 = vmin.f32 %v197, 1.0
    %v326 = vmin.f32 %v198, 1.0
    %v327 = vmin.f32 %v199, 1.0
    %v328 = vmin.f32 %v200, 1.0
    %v329 = vmin.f32 %v201, 1.0
    %v330 = vmin.f32 %v202, 1.0
    %v331 = vmin.f32 %v203, 1.0
    %v332 = vmin.f32 %v204, 1.0
    %v333 = vmin.f32 %v205, 1.0
    %v334 = vmin.f32 %v206, 1.0
    %v335 = vmin.f32 %v207, 1.0
    %v336 = vmin.f32 %v208, 1.0
    %v337 = vmin.f32 %v209, 1.0
    %v338 = vmin.f32 %v210, 1.0
    %v339 = vmin.f32 %v211, 1.0
    %v340 = vmin.f32 %v212, 1.0
    %v341 = vmin.f32 %v213, 1.0
    %v342 = vmin.f32 %v214, 1.0
    %v343 = vmin.f32 %v215, 1.0
    %v344 = vmin.f32 %v216, 1.0
    %v345 = vmin.f32 %v217, 1.0
    %v346 = vmin.f32 %v218, 1.0
    %v347 = vmin.f32 %v219, 1.0
    %v348 = vmin.f32 %v220, 1.0
    %v349 = vmin.f32 %v221, 1.0
    %v350 = vmin.f32 %v222, 1.0
    %v351 = vmin.f32 %v223, 1.0
    %v352 = vmin.f32 %v224, 1.0
    %v353 = vmin.f32 %v225, 1.0
    %v354 = vmin.f32 %v226, 1.0
    %v355 = vmin.f32 %v227, 1.0
    %v356 = vmin.f32 %v228, 1.0
    %v357 = vmin.f32 %v229, 1.0
    %v358 = vmin.f32 %v230, 1.0
    %v359 = vmin.f32 %v231, 1.0
    %v360 = vmin.f32 %v232, 1.0
    %v361 = vmin.f32 %v233, 1.0
    %v362 = vmin.f32 %v234, 1.0
    %v363 = vmin.f32 %v235, 1.0
    %v364 = vmin.f32 %v236, 1.0
    %v365 = vmin.f32 %v237, 1.0
    %v366 = vmin.f32 %v238, 1.0
    %v367 = vmin.f32 %v239, 1.0
    %v368 = vmin.f32 %v240, 1.0
    %v369 = vmin.f32 %v241, 1.0
    %v370 = vmin.f32 %v242, 1.0
    %v371 = vmin.f32 %v243, 1.0
    %v372 = vmin.f32 %v244, 1.0
    %v373 = vmin.f32 %v245, 1.0
    %v374 = vmin.f32 %v246, 1.0
    %v375 = vmin.f32 %v247, 1.0
    %v376 = vmin.f32 %v248, 1.0
    %v377 = vmin.f32 %v249, 1.0
    %v378 = vmin.f32 %v250, 1.0
    %v379 = vmin.f32 %v251, 1.0
    %v380 = vmin.f32 %v252, 1.0
    %v381 = vmin.f32 %v253, 1.0
    %v382 = vmin.f32 %v254, 1.0
    %v383 = vmin.f32 %v255, 1.0
    %v384 = vmin.f32 %v256, 1.0
    %v385 = vmin.f32 %v257, 1.0
    %v386 = vmin.f32 %v258, 1.0
    %v387 = vmin.f32 %v259, 1.0
    %v388 = vmin.f32 %v260, 1.0
    %v389 = vmin.f32 %v261, 1.0
    %v390 = vmin.f32 %v262, 1.0
    %v391 = vmin.f32 %v263, 1.0
    %v392 = vmin.f32 %v264, 1.0
    %v393 = vmin.f32 %v265, 1.0
    %v394 = vmin.f32 %v266, 1.0
    %v395 = vmin.f32 %v267, 1.0
    %v396 = vmin.f32 %v268, 1.0
    %v397 = vmin.f32 %v269, 1.0
    %v398 = vmin.f32 %v270, 1.0
    %v399 = vmin.f32 %v271, 1.0
    %v400 = vmin.f32 %v272, 1.0
    %v401 = vmin.f32 %v273, 1.0
    %v402 = vmin.f32 %v274, 1.0
    %v403 = vmin.f32 %v275, 1.0
    %v404 = vmin.f32 %v276, 1.0
    %v405 = vmin.f32 %v277, 1.0
    %v406 = vmin.f32 %v278, 1.0
    %v407 = vmul.f32 %v279, 15.0
    %v408 = vmul.f32 %v280, 15.0
    %v409 = vmul.f32 %v281, 15.0
    %v410 = vmul.f32 %v282, 15.0
    %v411 = vmul.f32 %v283, 15.0
    %v412 = vmul.f32 %v284, 15.0
    %v413 = vmul.f32 %v285, 15.0
    %v414 = vmul.f32 %v286, 15.0
    %v415 = vmul.f32 %v287, 15.0
    %v416 = vmul.f32 %v288, 15.0
    %v417 = vmul.f32 %v289, 15.0
    %v418 = vmul.f32 %v290, 15.0
    %v419 = vmul.f32 %v291, 15.0
    %v420 = vmul.f32 %v292, 15.0
    %v421 = vmul.f32 %v293, 15.0
    %v422 = vmul.f32 %v294, 15.0
    %v423 = vmul.f32 %v295, 15.0
    %v424 = vmul.f32 %v296, 15.0
    %v425 = vmul.f32 %v297, 15.0
    %v426 = vmul.f32 %v298, 15.0
    %v427 = vmul.f32 %v299, 15.0
    %v428 = vmul.f32 %v300, 15.0
    %v429 = vmul.f32 %v301, 15.0
    %v430 = vmul.f32 %v302, 15.0
    %v431 = vmul.f32 %v303, 15.0
    %v432 = vmul.f32 %v304, 15.0
    %v433 = vmul.f32 %v305, 15.0
    %v434 = vmul.f32 %v306, 15.0
    %v435 = vmul.f32 %v307, 15.0
    %v436 = vmul.f32 %v308, 15.0
    %v437 = vmul.f32 %v309, 15.0
    %v438 = vmul.f32 %v310, 15.0
    %v439 = vmul.f32 %v311, 15.0
    %v440 = vmul.f32 %v312, 15.0
    %v441 = vmul.f32 %v313, 15.0
    %v442 = vmul.f32 %v314, 15.0
    %v443 = vmul.f32 %v315, 15.0
    %v444 = vmul.f32 %v316, 15.0
    %v445 = vmul.f32 %v317, 15.0
    %v446 = vmul.f32 %v318, 15.0
    %v447 = vmul.f32 %v319, 15.0
    %v448 = vmul.f32 %v320, 15.0
    %v449 = vmul.f32 %v321, 15.0
    %v450 = vmul.f32 %v322, 15.0
    %v451 = vmul.f32 %v323, 15.0
    %v452 = vmul.f32 %v324, 15.0
    %v453 = vmul.f32 %v325, 15.0
    %v454 = vmul.f32 %v326, 15.0
    %v455 = vmul.f32 %v327, 15.0
    %v456 = vmul.f32 %v328, 15.0
    %v457 = vmul.f32 %v329, 15.0
    %v458 = vmul.f32 %v330, 15.0
    %v459 = vmul.f32 %v331, 15.0
    %v460 = vmul.f32 %v332, 15.0
    %v461 = vmul.f32 %v333, 15.0
    %v462 = vmul.f32 %v334, 15.0
    %v463 = vmul.f32 %v335, 15.0
    %v464 = vmul.f32 %v336, 15.0
    %v465 = vmul.f32 %v337, 15.0
    %v466 = vmul.f32 %v338, 15.0
    %v467 = vmul.f32 %v339, 15.0
    %v468 = vmul.f32 %v340, 15.0
    %v469 = vmul.f32 %v341, 15.0
    %v470 = vmul.f32 %v342, 15.0
    %v471 = vmul.f32 %v343, 15.0
    %v472 = vmul.f32 %v344, 15.0
    %v473 = vmul.f32 %v345, 15.0
    %v474 = vmul.f32 %v346, 15.0
    %v475 = vmul.f32 %v347, 15.0
    %v476 = vmul.f32 %v348, 15.0
    %v477 = vmul.f32 %v349, 15.0
    %v478 = vmul.f32 %v350, 15.0
    %v479 = vmul.f32 %v351, 15.0
    %v480 = vmul.f32 %v352, 15.0
    %v481 = vmul.f32 %v353, 15.0
    %v482 = vmul.f32 %v354, 15.0
    %v483 = vmul.f32 %v355, 15.0
    %v484 = vmul.f32 %v356, 15.0
    %v485 = vmul.f32 %v357, 15.0
    %v486 = vmul.f32 %v358, 15.0
    %v487 = vmul.f32 %v359, 15.0
    %v488 = vmul.f32 %v360, 15.0
    %v489 = vmul.f32 %v361, 15.0
    %v490 = vmul.f32 %v362, 15.0
    %v491 = vmul.f32 %v363, 15.0
    %v492 = vmul.f32 %v364, 15.0
    %v493 = vmul.f32 %v365, 15.0
    %v494 = vmul.f32 %v366, 15.0
    %v495 = vmul.f32 %v367, 15.0
    %v496 = vmul.f32 %v368, 15.0
    %v497 = vmul.f32 %v369, 15.0
    %v498 = vmul.f32 %v370, 15.0
    %v499 = vmul.f32 %v371, 15.0
    %v500 = vmul.f32 %v372, 15.0
    %v501 = vmul.f32 %v373, 15.0
    %v502 = vmul.f32 %v374, 15.0
    %v503 = vmul.f32 %v375, 15.0
    %v504 = vmul.f32 %v376, 15.0
    %v505 = vmul.f32 %v377, 15.0
    %v506 = vmul.f32 %v378, 15.0
    %v507 = vmul.f32 %v379, 15.0
    %v508 = vmul.f32 %v380, 15.0
    %v509 = vmul.f32 %v381, 15.0
    %v510 = vmul.f32 %v382, 15.0
    %v511 = vmul.f32 %v383, 15.0
    %v512 = vmul.f32 %v384, 15.0
    %v513 = vmul.f32 %v385, 15.0
    %v514 = vmul.f32 %v386, 15.0
    %v515 = vmul.f32 %v387, 15.0
    %v516 = vmul.f32 %v388, 15.0
    %v517 = vmul.f32 %v389, 15.0
    %v518 = vmul.f32 %v390, 15.0
    %v519 = vmul.f32 %v391, 15.0
    %v520 = vmul.f32 %v392, 15.0
    %v521 = vmul.f32 %v393, 15.0
    %v522 = vmul.f32 %v394, 15.0
    %v523 = vmul.f32 %v395, 15.0
    %v524 = vmul.f32 %v396, 15.0
    %v525 = vmul.f32 %v397, 15.0
    %v526 = vmul.f32 %v398, 15.0
    %v527 = vmul.f32 %v399, 15.0
    %v528 = vmul.f32 %v400, 15.0
    %v529 = vmul.f32 %v401, 15.0
    %v530 = vmul.f32 %v402, 15.0
    %v531 = vmul.f32 %v403, 15.0
    %v532 = vmul.f32 %v404, 15.0
    %v533 = vmul.f32 %v405, 15.0
    %v534 = vmul.f32 %v406, 15.0
    %v535 = vround.ne.pseudo %v407
    %v536 = vround.ne.pseudo %v408
    %v537 = vround.ne.pseudo %v409
    %v538 = vround.ne.pseudo %v410
    %v539 = vround.ne.pseudo %v411
    %v540 = vround.ne.pseudo %v412
    %v541 = vround.ne.pseudo %v413
    %v542 = vround.ne.pseudo %v414
    %v543 = vround.ne.pseudo %v415
    %v544 = vround.ne.pseudo %v416
    %v545 = vround.ne.pseudo %v417
    %v546 = vround.ne.pseudo %v418
    %v547 = vround.ne.pseudo %v419
    %v548 = vround.ne.pseudo %v420
    %v549 = vround.ne.pseudo %v421
    %v550 = vround.ne.pseudo %v422
    %v551 = vround.ne.pseudo %v423
    %v552 = vround.ne.pseudo %v424
    %v553 = vround.ne.pseudo %v425
    %v554 = vround.ne.pseudo %v426
    %v555 = vround.ne.pseudo %v427
    %v556 = vround.ne.pseudo %v428
    %v557 = vround.ne.pseudo %v429
    %v558 = vround.ne.pseudo %v430
    %v559 = vround.ne.pseudo %v431
    %v560 = vround.ne.pseudo %v432
    %v561 = vround.ne.pseudo %v433
    %v562 = vround.ne.pseudo %v434
    %v563 = vround.ne.pseudo %v435
    %v564 = vround.ne.pseudo %v436
    %v565 = vround.ne.pseudo %v437
    %v566 = vround.ne.pseudo %v438
    %v567 = vround.ne.pseudo %v439
    %v568 = vround.ne.pseudo %v440
    %v569 = vround.ne.pseudo %v441
    %v570 = vround.ne.pseudo %v442
    %v571 = vround.ne.pseudo %v443
    %v572 = vround.ne.pseudo %v444
    %v573 = vround.ne.pseudo %v445
    %v574 = vround.ne.pseudo %v446
    %v575 = vround.ne.pseudo %v447
    %v576 = vround.ne.pseudo %v448
    %v577 = vround.ne.pseudo %v449
    %v578 = vround.ne.pseudo %v450
    %v579 = vround.ne.pseudo %v451
    %v580 = vround.ne.pseudo %v452
    %v581 = vround.ne.pseudo %v453
    %v582 = vround.ne.pseudo %v454
    %v583 = vround.ne.pseudo %v455
    %v584 = vround.ne.pseudo %v456
    %v585 = vround.ne.pseudo %v457
    %v586 = vround.ne.pseudo %v458
    %v587 = vround.ne.pseudo %v459
    %v588 = vround.ne.pseudo %v460
    %v589 = vround.ne.pseudo %v461
    %v590 = vround.ne.pseudo %v462
    %v591 = vround.ne.pseudo %v463
    %v592 = vround.ne.pseudo %v464
    %v593 = vround.ne.pseudo %v465
    %v594 = vround.ne.pseudo %v466
    %v595 = vround.ne.pseudo %v467
    %v596 = vround.ne.pseudo %v468
    %v597 = vround.ne.pseudo %v469
    %v598 = vround.ne.pseudo %v470
    %v599 = vround.ne.pseudo %v471
    %v600 = vround.ne.pseudo %v472
    %v601 = vround.ne.pseudo %v473
    %v602 = vround.ne.pseudo %v474
    %v603 = vround.ne.pseudo %v475
    %v604 = vround.ne.pseudo %v476
    %v605 = vround.ne.pseudo %v477
    %v606 = vround.ne.pseudo %v478
    %v607 = vround.ne.pseudo %v479
    %v608 = vround.ne.pseudo %v480
    %v609 = vround.ne.pseudo %v481
    %v610 = vround.ne.pseudo %v482
    %v611 = vround.ne.pseudo %v483
    %v612 = vround.ne.pseudo %v484
    %v613 = vround.ne.pseudo %v485
    %v614 = vround.ne.pseudo %v486
    %v615 = vround.ne.pseudo %v487
    %v616 = vround.ne.pseudo %v488
    %v617 = vround.ne.pseudo %v489
    %v618 = vround.ne.pseudo %v490
    %v619 = vround.ne.pseudo %v491
    %v620 = vround.ne.pseudo %v492
    %v621 = vround.ne.pseudo %v493
    %v622 = vround.ne.pseudo %v494
    %v623 = vround.ne.pseudo %v495
    %v624 = vround.ne.pseudo %v496
    %v625 = vround.ne.pseudo %v497
    %v626 = vround.ne.pseudo %v498
    %v627 = vround.ne.pseudo %v499
    %v628 = vround.ne.pseudo %v500
    %v629 = vround.ne.pseudo %v501
    %v630 = vround.ne.pseudo %v502
    %v631 = vround.ne.pseudo %v503
    %v632 = vround.ne.pseudo %v504
    %v633 = vround.ne.pseudo %v505
    %v634 = vround.ne.pseudo %v506
    %v635 = vround.ne.pseudo %v507
    %v636 = vround.ne.pseudo %v508
    %v637 = vround.ne.pseudo %v509
    %v638 = vround.ne.pseudo %v510
    %v639 = vround.ne.pseudo %v511
    %v640 = vround.ne.pseudo %v512
    %v641 = vround.ne.pseudo %v513
    %v642 = vround.ne.pseudo %v514
    %v643 = vround.ne.pseudo %v515
    %v644 = vround.ne.pseudo %v516
    %v645 = vround.ne.pseudo %v517
    %v646 = vround.ne.pseudo %v518
    %v647 = vround.ne.pseudo %v519
    %v648 = vround.ne.pseudo %v520
    %v649 = vround.ne.pseudo %v521
    %v650 = vround.ne.pseudo %v522
    %v651 = vround.ne.pseudo %v523
    %v652 = vround.ne.pseudo %v524
    %v653 = vround.ne.pseudo %v525
    %v654 = vround.ne.pseudo %v526
    %v655 = vround.ne.pseudo %v527
    %v656 = vround.ne.pseudo %v528
    %v657 = vround.ne.pseudo %v529
    %v658 = vround.ne.pseudo %v530
    %v659 = vround.ne.pseudo %v531
    %v660 = vround.ne.pseudo %v532
    %v661 = vround.ne.pseudo %v533
    %v662 = vround.ne.pseudo %v534
    %v663 = vmul.f32 %v535, 0.06666667
    %v664 = vmul.f32 %v536, 0.06666667
    %v665 = vmul.f32 %v537, 0.06666667
    %v666 = vmul.f32 %v538, 0.06666667
    %v667 = vmul.f32 %v539, 0.06666667
    %v668 = vmul.f32 %v540, 0.06666667
    %v669 = vmul.f32 %v541, 0.06666667
    %v670 = vmul.f32 %v542, 0.06666667
    %v671 = vmul.f32 %v543, 0.06666667
    %v672 = vmul.f32 %v544, 0.06666667
    %v673 = vmul.f32 %v545, 0.06666667
    %v674 = vmul.f32 %v546, 0.06666667
    %v675 = vmul.f32 %v547, 0.06666667
    %v676 = vmul.f32 %v548, 0.06666667
    %v677 = vmul.f32 %v549, 0.06666667
    %v678 = vmul.f32 %v550, 0.06666667
    %v679 = vmul.f32 %v551, 0.06666667
    %v680 = vmul.f32 %v552, 0.06666667
    %v681 = vmul.f32 %v553, 0.06666667
    %v682 = vmul.f32 %v554, 0.06666667
    %v683 = vmul.f32 %v555, 0.06666667
    %v684 = vmul.f32 %v556, 0.06666667
    %v685 = vmul.f32 %v557, 0.06666667
    %v686 = vmul.f32 %v558, 0.06666667
    %v687 = vmul.f32 %v559, 0.06666667
    %v688 = vmul.f32 %v560, 0.06666667
    %v689 = vmul.f32 %v561, 0.06666667
    %v690 = vmul.f32 %v562, 0.06666667
    %v691 = vmul.f32 %v563, 0.06666667
    %v692 = vmul.f32 %v564, 0.06666667
    %v693 = vmul.f32 %v565, 0.06666667
    %v694 = vmul.f32 %v566, 0.06666667
    %v695 = vmul.f32 %v567, 0.06666667
    %v696 = vmul.f32 %v568, 0.06666667
    %v697 = vmul.f32 %v569, 0.06666667
    %v698 = vmul.f32 %v570, 0.06666667
    %v699 = vmul.f32 %v571, 0.06666667
    %v700 = vmul.f32 %v572, 0.06666667
    %v701 = vmul.f32 %v573, 0.06666667
    %v702 = vmul.f32 %v574, 0.06666667
    %v703 = vmul.f32 %v575, 0.06666667
    %v704 = vmul.f32 %v576, 0.06666667
    %v705 = vmul.f32 %v577, 0.06666667
    %v706 = vmul.f32 %v578, 0.06666667
    %v707 = vmul.f32 %v579, 0.06666667
    %v708 = vmul.f32 %v580, 0.06666667
    %v709 = vmul.f32 %v581, 0.06666667
    %v710 = vmul.f32 %v582, 0.06666667
    %v711 = vmul.f32 %v583, 0.06666667
    %v712 = vmul.f32 %v584, 0.06666667
    %v713 = vmul.f32 %v585, 0.06666667
    %v714 = vmul.f32 %v586, 0.06666667
    %v715 = vmul.f32 %v587, 0.06666667
    %v716 = vmul.f32 %v588, 0.06666667
    %v717 = vmul.f32 %v589, 0.06666667
    %v718 = vmul.f32 %v590, 0.06666667
    %v719 = vmul.f32 %v591, 0.06666667
    %v720 = vmul.f32 %v592, 0.06666667
    %v721 = vmul.f32 %v593, 0.06666667
    %v722 = vmul.f32 %v594, 0.06666667
    %v723 = vmul.f32 %v595, 0.06666667
    %v724 = vmul.f32 %v596, 0.06666667
    %v725 = vmul.f32 %v597, 0.06666667
    %v726 = vmul.f32 %v598, 0.06666667
    %v727 = vmul.f32 %v599, 0.06666667
    %v728 = vmul.f32 %v600, 0.06666667
    %v729 = vmul.f32 %v601, 0.06666667
    %v730 = vmul.f32 %v602, 0.06666667
    %v731 = vmul.f32 %v603, 0.06666667
    %v732 = vmul.f32 %v604, 0.06666667
    %v733 = vmul.f32 %v605, 0.06666667
    %v734 = vmul.f32 %v606, 0.06666667
    %v735 = vmul.f32 %v607, 0.06666667
    %v736 = vmul.f32 %v608, 0.06666667
    %v737 = vmul.f32 %v609, 0.06666667
    %v738 = vmul.f32 %v610, 0.06666667
    %v739 = vmul.f32 %v611, 0.06666667
    %v740 = vmul.f32 %v612, 0.06666667
    %v741 = vmul.f32 %v613, 0.06666667
    %v742 = vmul.f32 %v614, 0.06666667
    %v743 = vmul.f32 %v615, 0.06666667
    %v744 = vmul.f32 %v616, 0.06666667
    %v745 = vmul.f32 %v617, 0.06666667
    %v746 = vmul.f32 %v618, 0.06666667
    %v747 = vmul.f32 %v619, 0.06666667
    %v748 = vmul.f32 %v620, 0.06666667
    %v749 = vmul.f32 %v621, 0.06666667
    %v750 = vmul.f32 %v622, 0.06666667
    %v751 = vmul.f32 %v623, 0.06666667
    %v752 = vmul.f32 %v624, 0.06666667
    %v753 = vmul.f32 %v625, 0.06666667
    %v754 = vmul.f32 %v626, 0.06666667
    %v755 = vmul.f32 %v627, 0.06666667
    %v756 = vmul.f32 %v628, 0.06666667
    %v757 = vmul.f32 %v629, 0.06666667
    %v758 = vmul.f32 %v630, 0.06666667
    %v759 = vmul.f32 %v631, 0.06666667
    %v760 = vmul.f32 %v632, 0.06666667
    %v761 = vmul.f32 %v633, 0.06666667
    %v762 = vmul.f32 %v634, 0.06666667
    %v763 = vmul.f32 %v635, 0.06666667
    %v764 = vmul.f32 %v636, 0.06666667
    %v765 = vmul.f32 %v637, 0.06666667
    %v766 = vmul.f32 %v638, 0.06666667
    %v767 = vmul.f32 %v639, 0.06666667
    %v768 = vmul.f32 %v640, 0.06666667
    %v769 = vmul.f32 %v641, 0.06666667
    %v770 = vmul.f32 %v642, 0.06666667
    %v771 = vmul.f32 %v643, 0.06666667
    %v772 = vmul.f32 %v644, 0.06666667
    %v773 = vmul.f32 %v645, 0.06666667
    %v774 = vmul.f32 %v646, 0.06666667
    %v775 = vmul.f32 %v647, 0.06666667
    %v776 = vmul.f32 %v648, 0.06666667
    %v777 = vmul.f32 %v649, 0.06666667
    %v778 = vmul.f32 %v650, 0.06666667
    %v779 = vmul.f32 %v651, 0.06666667
    %v780 = vmul.f32 %v652, 0.06666667
    %v781 = vmul.f32 %v653, 0.06666667
    %v782 = vmul.f32 %v654, 0.06666667
    %v783 = vmul.f32 %v655, 0.06666667
    %v784 = vmul.f32 %v656, 0.06666667
    %v785 = vmul.f32 %v657, 0.06666667
    %v786 = vmul.f32 %v658, 0.06666667
    %v787 = vmul.f32 %v659, 0.06666667
    %v788 = vmul.f32 %v660, 0.06666667
    %v789 = vmul.f32 %v661, 0.06666667
    %v790 = vmul.f32 %v662, 0.06666667
    %791 = vst [vmem:[#allocation5] sm:$0xff] %v663
    %792 = vst [vmem:[#allocation5 + $0x8] sm:$0xff] %v664
    %793 = vst [vmem:[#allocation5 + $0x10] sm:$0xff] %v665
    %794 = vst [vmem:[#allocation5 + $0x18] sm:$0xff] %v666
    %795 = vst [vmem:[#allocation5 + $0x20] sm:$0xff] %v667
    %796 = vst [vmem:[#allocation5 + $0x28] sm:$0xff] %v668
    %797 = vst [vmem:[#allocation5 + $0x30] sm:$0xff] %v669
    %798 = vst [vmem:[#allocation5 + $0x38] sm:$0xff] %v670
    %799 = vst [vmem:[#allocation5 + $0x40] sm:$0xff] %v671
    %800 = vst [vmem:[#allocation5 + $0x48] sm:$0xff] %v672
    %801 = vst [vmem:[#allocation5 + $0x50] sm:$0xff] %v673
    %802 = vst [vmem:[#allocation5 + $0x58] sm:$0xff] %v674
    %803 = vst [vmem:[#allocation5 + $0x60] sm:$0xff] %v675
    %804 = vst [vmem:[#allocation5 + $0x68] sm:$0xff] %v676
    %805 = vst [vmem:[#allocation5 + $0x70] sm:$0xff] %v677
    %806 = vst [vmem:[#allocation5 + $0x78] sm:$0xff] %v678
    %807 = vst [vmem:[#allocation5 + $0x80] sm:$0xff] %v679
    %808 = vst [vmem:[#allocation5 + $0x88] sm:$0xff] %v680
    %809 = vst [vmem:[#allocation5 + $0x90] sm:$0xff] %v681
    %810 = vst [vmem:[#allocation5 + $0x98] sm:$0xff] %v682
    %811 = vst [vmem:[#allocation5 + $0xa0] sm:$0xff] %v683
    %812 = vst [vmem:[#allocation5 + $0xa8] sm:$0xff] %v684
    %813 = vst [vmem:[#allocation5 + $0xb0] sm:$0xff] %v685
    %814 = vst [vmem:[#allocation5 + $0xb8] sm:$0xff] %v686
    %815 = vst [vmem:[#allocation5 + $0xc0] sm:$0xff] %v687
    %816 = vst [vmem:[#allocation5 + $0xc8] sm:$0xff] %v688
    %817 = vst [vmem:[#allocation5 + $0xd0] sm:$0xff] %v689
    %818 = vst [vmem:[#allocation5 + $0xd8] sm:$0xff] %v690
    %819 = vst [vmem:[#allocation5 + $0xe0] sm:$0xff] %v691
    %820 = vst [vmem:[#allocation5 + $0xe8] sm:$0xff] %v692
    %821 = vst [vmem:[#allocation5 + $0xf0] sm:$0xff] %v693
    %822 = vst [vmem:[#allocation5 + $0xf8] sm:$0xff] %v694
    %823 = vst [vmem:[#allocation5 + $0x100] sm:$0xff] %v695
    %824 = vst [vmem:[#allocation5 + $0x108] sm:$0xff] %v696
    %825 = vst [vmem:[#allocation5 + $0x110] sm:$0xff] %v697
    %826 = vst [vmem:[#allocation5 + $0x118] sm:$0xff] %v698
    %827 = vst [vmem:[#allocation5 + $0x120] sm:$0xff] %v699
    %828 = vst [vmem:[#allocation5 + $0x128] sm:$0xff] %v700
    %829 = vst [vmem:[#allocation5 + $0x130] sm:$0xff] %v701
    %830 = vst [vmem:[#allocation5 + $0x138] sm:$0xff] %v702
    %831 = vst [vmem:[#allocation5 + $0x140] sm:$0xff] %v703
    %832 = vst [vmem:[#allocation5 + $0x148] sm:$0xff] %v704
    %833 = vst [vmem:[#allocation5 + $0x150] sm:$0xff] %v705
    %834 = vst [vmem:[#allocation5 + $0x158] sm:$0xff] %v706
    %835 = vst [vmem:[#allocation5 + $0x160] sm:$0xff] %v707
    %836 = vst [vmem:[#allocation5 + $0x168] sm:$0xff] %v708
    %837 = vst [vmem:[#allocation5 + $0x170] sm:$0xff] %v709
    %838 = vst [vmem:[#allocation5 + $0x178] sm:$0xff] %v710
    %839 = vst [vmem:[#allocation5 + $0x180] sm:$0xff] %v711
    %840 = vst [vmem:[#allocation5 + $0x188] sm:$0xff] %v712
    %841 = vst [vmem:[#allocation5 + $0x190] sm:$0xff] %v713
    %842 = vst [vmem:[#allocation5 + $0x198] sm:$0xff] %v714
    %843 = vst [vmem:[#allocation5 + $0x1a0] sm:$0xff] %v715
    %844 = vst [vmem:[#allocation5 + $0x1a8] sm:$0xff] %v716
    %845 = vst [vmem:[#allocation5 + $0x1b0] sm:$0xff] %v717
    %846 = vst [vmem:[#allocation5 + $0x1b8] sm:$0xff] %v718
    %847 = vst [vmem:[#allocation5 + $0x1c0] sm:$0xff] %v719
    %848 = vst [vmem:[#allocation5 + $0x1c8] sm:$0xff] %v720
    %849 = vst [vmem:[#allocation5 + $0x1d0] sm:$0xff] %v721
    %850 = vst [vmem:[#allocation5 + $0x1d8] sm:$0xff] %v722
    %851 = vst [vmem:[#allocation5 + $0x1e0] sm:$0xff] %v723
    %852 = vst [vmem:[#allocation5 + $0x1e8] sm:$0xff] %v724
    %853 = vst [vmem:[#allocation5 + $0x1f0] sm:$0xff] %v725
    %854 = vst [vmem:[#allocation5 + $0x1f8] sm:$0xff] %v726
    %855 = vst [vmem:[#allocation5 + $0x200] sm:$0xff] %v727
    %856 = vst [vmem:[#allocation5 + $0x208] sm:$0xff] %v728
    %857 = vst [vmem:[#allocation5 + $0x210] sm:$0xff] %v729
    %858 = vst [vmem:[#allocation5 + $0x218] sm:$0xff] %v730
    %859 = vst [vmem:[#allocation5 + $0x220] sm:$0xff] %v731
    %860 = vst [vmem:[#allocation5 + $0x228] sm:$0xff] %v732
    %861 = vst [vmem:[#allocation5 + $0x230] sm:$0xff] %v733
    %862 = vst [vmem:[#allocation5 + $0x238] sm:$0xff] %v734
    %863 = vst [vmem:[#allocation5 + $0x240] sm:$0xff] %v735
    %864 = vst [vmem:[#allocation5 + $0x248] sm:$0xff] %v736
    %865 = vst [vmem:[#allocation5 + $0x250] sm:$0xff] %v737
    %866 = vst [vmem:[#allocation5 + $0x258] sm:$0xff] %v738
    %867 = vst [vmem:[#allocation5 + $0x260] sm:$0xff] %v739
    %868 = vst [vmem:[#allocation5 + $0x268] sm:$0xff] %v740
    %869 = vst [vmem:[#allocation5 + $0x270] sm:$0xff] %v741
    %870 = vst [vmem:[#allocation5 + $0x278] sm:$0xff] %v742
    %871 = vst [vmem:[#allocation5 + $0x280] sm:$0xff] %v743
    %872 = vst [vmem:[#allocation5 + $0x288] sm:$0xff] %v744
    %873 = vst [vmem:[#allocation5 + $0x290] sm:$0xff] %v745
    %874 = vst [vmem:[#allocation5 + $0x298] sm:$0xff] %v746
    %875 = vst [vmem:[#allocation5 + $0x2a0] sm:$0xff] %v747
    %876 = vst [vmem:[#allocation5 + $0x2a8] sm:$0xff] %v748
    %877 = vst [vmem:[#allocation5 + $0x2b0] sm:$0xff] %v749
    %878 = vst [vmem:[#allocation5 + $0x2b8] sm:$0xff] %v750
    %879 = vst [vmem:[#allocation5 + $0x2c0] sm:$0xff] %v751
    %880 = vst [vmem:[#allocation5 + $0x2c8] sm:$0xff] %v752
    %881 = vst [vmem:[#allocation5 + $0x2d0] sm:$0xff] %v753
    %882 = vst [vmem:[#allocation5 + $0x2d8] sm:$0xff] %v754
    %883 = vst [vmem:[#allocation5 + $0x2e0] sm:$0xff] %v755
    %884 = vst [vmem:[#allocation5 + $0x2e8] sm:$0xff] %v756
    %885 = vst [vmem:[#allocation5 + $0x2f0] sm:$0xff] %v757
    %886 = vst [vmem:[#allocation5 + $0x2f8] sm:$0xff] %v758
    %887 = vst [vmem:[#allocation5 + $0x300] sm:$0xff] %v759
    %888 = vst [vmem:[#allocation5 + $0x308] sm:$0xff] %v760
    %889 = vst [vmem:[#allocation5 + $0x310] sm:$0xff] %v761
    %890 = vst [vmem:[#allocation5 + $0x318] sm:$0xff] %v762
    %891 = vst [vmem:[#allocation5 + $0x320] sm:$0xff] %v763
    %892 = vst [vmem:[#allocation5 + $0x328] sm:$0xff] %v764
    %893 = vst [vmem:[#allocation5 + $0x330] sm:$0xff] %v765
    %894 = vst [vmem:[#allocation5 + $0x338] sm:$0xff] %v766
    %895 = vst [vmem:[#allocation5 + $0x340] sm:$0xff] %v767
    %896 = vst [vmem:[#allocation5 + $0x348] sm:$0xff] %v768
    %897 = vst [vmem:[#allocation5 + $0x350] sm:$0xff] %v769
    %898 = vst [vmem:[#allocation5 + $0x358] sm:$0xff] %v770
    %899 = vst [vmem:[#allocation5 + $0x360] sm:$0xff] %v771
    %900 = vst [vmem:[#allocation5 + $0x368] sm:$0xff] %v772
    %901 = vst [vmem:[#allocation5 + $0x370] sm:$0xff] %v773
    %902 = vst [vmem:[#allocation5 + $0x378] sm:$0xff] %v774
    %903 = vst [vmem:[#allocation5 + $0x380] sm:$0xff] %v775
    %904 = vst [vmem:[#allocation5 + $0x388] sm:$0xff] %v776
    %905 = vst [vmem:[#allocation5 + $0x390] sm:$0xff] %v777
    %906 = vst [vmem:[#allocation5 + $0x398] sm:$0xff] %v778
    %907 = vst [vmem:[#allocation5 + $0x3a0] sm:$0xff] %v779
    %908 = vst [vmem:[#allocation5 + $0x3a8] sm:$0xff] %v780
    %909 = vst [vmem:[#allocation5 + $0x3b0] sm:$0xff] %v781
    %910 = vst [vmem:[#allocation5 + $0x3b8] sm:$0xff] %v782
    %911 = vst [vmem:[#allocation5 + $0x3c0] sm:$0xff] %v783
    %912 = vst [vmem:[#allocation5 + $0x3c8] sm:$0xff] %v784
    %913 = vst [vmem:[#allocation5 + $0x3d0] sm:$0xff] %v785
    %914 = vst [vmem:[#allocation5 + $0x3d8] sm:$0xff] %v786
    %915 = vst [vmem:[#allocation5 + $0x3e0] sm:$0xff] %v787
    %916 = vst [vmem:[#allocation5 + $0x3e8] sm:$0xff] %v788
    %917 = vst [vmem:[#allocation5 + $0x3f0] sm:$0xff] %v789
    %918 = vst [vmem:[#allocation5 + $0x3f8] sm:$0xff] %v790
    // Predicated region
    $region10: #{tpu_custom_call.1} parent=1 // pred_check
      _
    $region11: #{tpu_custom_call.1} parent=1 // pred_check_branch
      %920 = sbr.rel (0) target = $region13
    $region12: #{tpu_custom_call.1} parent=1 // pred_region
      %s922 = ssub.s32 16384, 16384
      %923 = vsyncadd [#allocation4], %s922
      %s924 = sshll.u32 [#allocation5], 4
      %s925 = int_to_ptr.vmem [resolvable:$true] %s924
      %930 = dma.vmem_to_hbm [thread:$0]  %s925, 16384, %s1, [#allocation4], 4096, 4096, 256
    $region13: #{tpu_custom_call.1} parent=1 // pred_fallthru
      _
    // Predicated region
    $region14: #{tpu_custom_call.1} parent=1 // pred_check
      _
    $region15: #{tpu_custom_call.1} parent=1 // pred_check_branch
      %932 = sbr.rel (0) target = $region17
    $region16: #{tpu_custom_call.1} parent=1 // pred_region
      %933 = dma.done [#allocation4], 16384
    $region17: #{tpu_custom_call.1} parent=1 // pred_fallthru
      _
    %934 = vsyncpa [#allocation3], 1
    %935 = vsyncpa [#allocation4], 1

</llo_original>
